<compile_context>
chip_gen: v7x
topology: tpu7x:2x2x1
jax: 0.10.0
libtpu: 0.0.40
codegen_flags: <defaults>
</compile_context>

<pallas_src>
import functools

import jax
import jax.numpy as jnp
from jax.experimental import pallas as pl
from jax.experimental.pallas import tpu as pltpu


def _round_up(x: int, m: int) -> int:
    return (x + m - 1) // m * m


def _pick_tile(dim_pad: int, unit: int, cap: int) -> int:
    """Largest multiple of `unit` that divides dim_pad and is <= cap."""
    best = unit
    t = unit
    limit = min(dim_pad, cap)
    while t <= limit:
        if dim_pad % t == 0:
            best = t
        t += unit
    return best


def _tile_plan(B: int, F: int, N: int):
    """Padded sizes + tile shapes shared by prepare_params and model_forward."""
    b_pad = _round_up(B, 16)          # bf16 packs 2 rows / sublane -> 16
    f_pad = _round_up(F, 128)
    n_pad = _round_up(N, 128)
    tm = _pick_tile(b_pad, 16, 256)
    tk = _pick_tile(f_pad, 128, 2048)
    tn = _pick_tile(n_pad, 128, 1024)
    # Megacore: make sure at least one "parallel" grid axis has extent >= 2
    # when there is enough output width to split.
    if b_pad // tm == 1 and n_pad // tn == 1 and n_pad >= 256:
        tn = _pick_tile(n_pad, 128, n_pad // 2)
    return tm, tk, tn, b_pad, f_pad, n_pad


def _matmul_bias_kernel(x_ref, w_ref, b_ref, o_ref):
    """out[i,j] = sum_k x[i,k] @ w[k,j] + b[j]; K-tiled, accumulate in o_ref (f32)."""
    k = pl.program_id(2)

    @pl.when(k == 0)
    def _():
        o_ref[...] = jnp.zeros_like(o_ref)

    o_ref[...] += jnp.dot(
        x_ref[...], w_ref[...], preferred_element_type=jnp.float32
    )

    @pl.when(k == pl.num_programs(2) - 1)
    def _():
        o_ref[...] += b_ref[...]          # (1, tn) broadcasts over (tm, tn)


def prepare_params(mean_c, std_c, weight, bias, input_chw):
    """One-time fold of the normalization into the linear layer + bf16 cast + pad.

    Returns (w_p, b_p) ready to be reused across every model_forward call.
    """
    C, H, W = input_chw
    F = C * H * W
    N = weight.shape[1]

    invstd_c = 1.0 / std_c
    invstd_f = jnp.broadcast_to(invstd_c[:, None, None], (C, H, W)).reshape(F)
    mean_f = jnp.broadcast_to(mean_c[:, None, None], (C, H, W)).reshape(F)
    w_eff = weight * invstd_f[:, None]                 # [F, N]  f32
    b_eff = bias - (mean_f * invstd_f) @ weight        # [N]     f32

    _, _, _, _, f_pad, n_pad = _tile_plan(1, F, N)

    w_p = w_eff.astype(jnp.bfloat16)
    if (F, N) != (f_pad, n_pad):
        w_p = jnp.pad(w_p, ((0, f_pad - F), (0, n_pad - N)))
    b_p = b_eff.reshape(1, N).astype(jnp.float32)
    if N != n_pad:
        b_p = jnp.pad(b_p, ((0, 0), (0, n_pad - N)))
    return w_p, b_p


@functools.partial(jax.jit, static_argnames=("num_classes",))
def model_forward(x_nchw, w_p, b_p, num_classes):
    """Fused data_normalize + Flatten + Linear forward.

    x_nchw : [B, C, H, W] float32
    w_p    : [f_pad, n_pad] bfloat16   (from prepare_params, reused every call)
    b_p    : [1, n_pad]     float32    (from prepare_params)
    returns: [B, num_classes] float32
    """
    B, C, H, W = x_nchw.shape
    F = C * H * W
    N = num_classes

    tm, tk, tn, b_pad, f_pad, n_pad = _tile_plan(B, F, N)
    assert w_p.shape == (f_pad, n_pad), (w_p.shape, (f_pad, n_pad))
    assert b_p.shape == (1, n_pad)

    # Only per-call activation work: flatten, bf16 cast, pad iff needed.
    x_flat = x_nchw.reshape(B, F).astype(jnp.bfloat16)
    if (B, F) != (b_pad, f_pad):
        x_flat = jnp.pad(x_flat, ((0, b_pad - B), (0, f_pad - F)))

    grid = (b_pad // tm, n_pad // tn, f_pad // tk)

    # Weight stream: deepen pipelining when the batch tile is tiny and the
    # K grid is deep (little compute per step to hide DMA behind).
    w_buffers = 2
    if tm <= 64 and grid[2] > 2:
        w_buffers = 3
        w_spec = pl.BlockSpec(
            (tk, tn), lambda i, j, k: (k, j), pipeline_mode=pl.Buffered(3)
        )
    else:
        w_spec = pl.BlockSpec((tk, tn), lambda i, j, k: (k, j))

    # Explicit VMEM budget: double(or triple)-buffered inputs + resident output.
    vmem_bytes = (
        2 * tm * tk * 2            # x tiles (bf16)
        + w_buffers * tk * tn * 2  # weight tiles (bf16)
        + 2 * tn * 4               # bias tiles (f32)
        + 2 * tm * tn * 4          # output tiles (f32)
        + (2 << 20)                # headroom
    )
    vmem_limit = min(48 << 20, max(vmem_bytes, 32 << 20))

    out_pad = pl.pallas_call(
        _matmul_bias_kernel,
        out_shape=jax.ShapeDtypeStruct((b_pad, n_pad), jnp.float32),
        grid_spec=pltpu.PrefetchScalarGridSpec(
            num_scalar_prefetch=0,
            grid=grid,
            in_specs=[
                pl.BlockSpec((tm, tk), lambda i, j, k: (i, k)),   # activations
                w_spec,                                           # weight
                pl.BlockSpec((1, tn), lambda i, j, k: (0, j)),    # bias
            ],
            out_specs=pl.BlockSpec((tm, tn), lambda i, j, k: (i, j)),
        ),
        compiler_params=pltpu.CompilerParams(
            dimension_semantics=("parallel", "parallel", "arbitrary"),
            vmem_limit_bytes=vmem_limit,
        ),
        cost_estimate=pl.CostEstimate(
            flops=2 * b_pad * f_pad * n_pad,
            transcendentals=0,
            bytes_accessed=f_pad * n_pad * 2 + b_pad * f_pad * 2 + b_pad * n_pad * 4,
        ),
    )(x_flat, w_p, b_p)

    if (B, N) != (b_pad, n_pad):
        return out_pad[:B, :N]
    return out_pad


def reference_forward(x_nchw, mean_c, std_c, weight, bias):
    """Pure-JAX f32 reference matching the PyTorch module semantics."""
    B, C, H, W = x_nchw.shape
    xn = (x_nchw - mean_c[None, :, None, None]) / std_c[None, :, None, None]
    return xn.reshape(B, C * H * W) @ weight + bias[None, :]


if __name__ == "__main__":
    # Small shapes consistent with the module's forward (image-like NCHW input).
    B, C, H, W = 2, 4, 16, 16
    NUM_CLASSES = 32
    F = C * H * W

    key = jax.random.PRNGKey(0)
    kx, kw, kb = jax.random.split(key, 3)

    x = jax.random.normal(kx, (B, C, H, W), dtype=jnp.float32)

    # Deterministic "data_normalize" parameters (per-channel mean/std).
    mean_c = jnp.array([0.485, 0.456, 0.406, 0.5], dtype=jnp.float32)
    std_c = jnp.array([0.229, 0.224, 0.225, 0.25], dtype=jnp.float32)

    # Deterministic "net" (Linear) parameters, stored as [F, N].
    weight = jax.random.normal(kw, (F, NUM_CLASSES), dtype=jnp.float32) * 0.02
    bias = jax.random.normal(kb, (NUM_CLASSES,), dtype=jnp.float32) * 0.01

    # One-time parameter preparation (reused across calls).
    w_p, b_p = prepare_params(mean_c, std_c, weight, bias, (C, H, W))
    w_p, b_p = jax.block_until_ready((w_p, b_p))

    out = model_forward(x, w_p, b_p, NUM_CLASSES)
    out = jax.block_until_ready(out)

    ref = reference_forward(x, mean_c, std_c, weight, bias)
    assert out.shape == (B, NUM_CLASSES)
    # bf16 MXU inputs with f32 accumulation: loosened tolerance vs f32 reference.
    assert jnp.allclose(out, ref, atol=3e-2, rtol=3e-2), (
        f"max abs err {jnp.max(jnp.abs(out - ref))}"
    )

    print("KERNEL_OK")
</pallas_src>

<mosaic_0001>
module attributes {stable_mosaic.version = 11 : i64} {
  func.func @_matmul_bias_kernel(%arg0: i32, %arg1: i32, %arg2: i32, %arg3: memref<16x1024xbf16, #tpu.memory_space<vmem>>, %arg4: memref<1024x128xbf16, #tpu.memory_space<vmem>>, %arg5: memref<1x128xf32, #tpu.memory_space<vmem>>, %arg6: memref<16x128xf32, #tpu.memory_space<vmem>>) attributes {dimension_semantics = [#tpu.dimension_semantics<parallel>, #tpu.dimension_semantics<parallel>, #tpu.dimension_semantics<arbitrary>], iteration_bounds = array<i64: 1, 1, 1>, scalar_prefetch = 0 : i64, scratch_operands = 0 : i64, tpu.core_type = #tpu.core_type<tc>, window_params = [{transform_indices = @transform_0, window_bounds = array<i64: 16, 1024>}, {transform_indices = @transform_1, window_bounds = array<i64: 1024, 128>}, {transform_indices = @transform_2, window_bounds = array<i64: 1, 128>}, {transform_indices = @transform_3, window_bounds = array<i64: 16, 128>}]} {
    %c0_i32 = arith.constant 0 : i32
    %0 = arith.cmpi eq, %arg2, %c0_i32 : i32
    %1 = arith.extui %0 : i1 to i32
    %c0_i32_0 = arith.constant 0 : i32
    %2 = arith.cmpi ne, %1, %c0_i32_0 : i32
    scf.if %2 {
      %cst_10 = arith.constant 0.000000e+00 : f32
      %12 = vector.broadcast %cst_10 : f32 to vector<16x128xf32>
      %c0_11 = arith.constant 0 : index
      %c0_12 = arith.constant 0 : index
      %13 = vector.load %arg6[%c0_11, %c0_12] : memref<16x128xf32, #tpu.memory_space<vmem>>, vector<16x128xf32>
      tpu.vector_store %arg6[%c0_11, %c0_12], %12 {strides = array<i32>} : memref<16x128xf32, #tpu.memory_space<vmem>>, vector<16x128xf32>,
    } else {
    }
    %c0 = arith.constant 0 : index
    %c0_1 = arith.constant 0 : index
    %3 = vector.load %arg6[%c0, %c0_1] : memref<16x128xf32, #tpu.memory_space<vmem>>, vector<16x128xf32>
    %c0_2 = arith.constant 0 : index
    %c0_3 = arith.constant 0 : index
    %4 = vector.load %arg3[%c0_2, %c0_3] : memref<16x1024xbf16, #tpu.memory_space<vmem>>, vector<16x1024xbf16>
    %c0_4 = arith.constant 0 : index
    %c0_5 = arith.constant 0 : index
    %5 = vector.load %arg4[%c0_4, %c0_5] : memref<1024x128xbf16, #tpu.memory_space<vmem>>, vector<1024x128xbf16>
    %cst = arith.constant dense<0.000000e+00> : vector<16x128xf32>
    %6 = tpu.matmul %4, %5, %cst {dimension_numbers = #tpu.dot_dimension_numbers<[1], [0], [0], [1], [0, 0, 1, 1], [], []>} : vector<16x1024xbf16>, vector<1024x128xbf16>, vector<16x128xf32> -> vector<16x128xf32>
    %7 = arith.addf %3, %6 : vector<16x128xf32>
    %c0_6 = arith.constant 0 : index
    %c0_7 = arith.constant 0 : index
    %8 = vector.load %arg6[%c0_6, %c0_7] : memref<16x128xf32, #tpu.memory_space<vmem>>, vector<16x128xf32>
    tpu.vector_store %arg6[%c0_6, %c0_7], %7 {strides = array<i32>} : memref<16x128xf32, #tpu.memory_space<vmem>>, vector<16x128xf32>,
    %c0_i32_8 = arith.constant 0 : i32
    %9 = arith.cmpi eq, %arg2, %c0_i32_8 : i32
    %10 = arith.extui %9 : i1 to i32
    %c0_i32_9 = arith.constant 0 : i32
    %11 = arith.cmpi ne, %10, %c0_i32_9 : i32
    scf.if %11 {
      %c0_10 = arith.constant 0 : index
      %c0_11 = arith.constant 0 : index
      %12 = vector.load %arg6[%c0_10, %c0_11] : memref<16x128xf32, #tpu.memory_space<vmem>>, vector<16x128xf32>
      %c0_12 = arith.constant 0 : index
      %c0_13 = arith.constant 0 : index
      %13 = vector.load %arg5[%c0_12, %c0_13] : memref<1x128xf32, #tpu.memory_space<vmem>>, vector<1x128xf32>
      %14 = vector.broadcast %13 : vector<1x128xf32> to vector<16x128xf32>
      %15 = arith.addf %12, %14 : vector<16x128xf32>
      %c0_14 = arith.constant 0 : index
      %c0_15 = arith.constant 0 : index
      %16 = vector.load %arg6[%c0_14, %c0_15] : memref<16x128xf32, #tpu.memory_space<vmem>>, vector<16x128xf32>
      tpu.vector_store %arg6[%c0_14, %c0_15], %15 {strides = array<i32>} : memref<16x128xf32, #tpu.memory_space<vmem>>, vector<16x128xf32>,
    } else {
    }
    return
  }
  func.func @transform_0(%arg0: i32, %arg1: i32, %arg2: i32) -> (i32, i32) {
    %c0_i32 = arith.constant 0 : i32
    return %arg0, %arg2 : i32, i32
  }
  func.func @transform_1(%arg0: i32, %arg1: i32, %arg2: i32) -> (i32, i32) {
    %c0_i32 = arith.constant 0 : i32
    return %arg2, %arg1 : i32, i32
  }
  func.func @transform_2(%arg0: i32, %arg1: i32, %arg2: i32) -> (i32, i32) {
    %c0_i32 = arith.constant 0 : i32
    %c0_i32_0 = arith.constant 0 : i32
    return %c0_i32, %arg1 : i32, i32
  }
  func.func @transform_3(%arg0: i32, %arg1: i32, %arg2: i32) -> (i32, i32) {
    %c0_i32 = arith.constant 0 : i32
    return %arg0, %arg1 : i32, i32
  }
}

</mosaic_0001>

<llo_original>
// kernel: model_forward.1
$region0: #{model_forward.1}
  #allocation0 [shape = 'u32[]', space=smem, size = 0x4, offset = 0x4, fixed_abs, tag = 'smem constant byte address 0x4 - core index']
  #allocation1 [shape = 'u32[144,128]{1,0:T(1,128)}', space=vmem, size = 0x12000, scoped, tag = 'internal scratch']
  %s0 = inlined_call_operand.vmem [shape: bf16[16,1024], index: 0, kind: input, shape index: {}]
  %s1 = inlined_call_operand.hbm [shape: bf16[1024,128], index: 1, kind: input, shape index: {}]
  %s2 = inlined_call_operand.vmem [shape: f32[1,128], index: 2, kind: input, shape index: {}]
  %s3 = inlined_call_operand.vmem [shape: f32[16,128], index: 3, kind: output, shape index: {}]
  %s4 = sld [smem:[#allocation0]]
  $region34: #{model_forward.1} parent=0
    _
  %s6 = ssub.s32 1, %s4
  %s7 = scalar_select 0, %s6, %s4
  $region1: #{model_forward.1} parent=0
    #allocation2 [shape = 'u8[262144]{0}', space=vmem, size = 0x40000, scoped, tag = 'input window, operand 1, single buffered']
    #allocation3 [shape = 's32[1]{0}', space=sflag, size = 0x4, scoped, tag = 'scoped memory for model_forward.1']
    %8 = vsyncpa [#allocation3], 0
    // Predicated region
    $region2: #{model_forward.1} parent=1 // pred_check
      _
    $region3: #{model_forward.1} parent=1 // pred_check_branch
      %10 = sbr.rel (0) target = $region5
    $region4: #{model_forward.1} parent=1 // pred_region
      _
    $region5: #{model_forward.1} parent=1 // pred_fallthru
      _
    // Predicated region
    $region6: #{model_forward.1} parent=1 // pred_check
      _
    $region7: #{model_forward.1} parent=1 // pred_check_branch
      %12 = sbr.rel (0) target = $region9
    $region8: #{model_forward.1} parent=1 // pred_region
      %s14 = ssub.s32 8192, 8192
      %15 = vsyncadd [#allocation3], %s14
      %s16 = sshll.u32 [#allocation2], 4
      %s17 = int_to_ptr.vmem [resolvable:$true] %s16
      %22 = dma.hbm_to_vmem [thread:$0]  %s1, 8192, %s17, [#allocation3], 64, 64, 4
    $region9: #{model_forward.1} parent=1 // pred_fallthru
      _
    // Predicated region
    $region10: #{model_forward.1} parent=1 // pred_check
      _
    $region11: #{model_forward.1} parent=1 // pred_check_branch
      %24 = sbr.rel (0) target = $region13
    $region12: #{model_forward.1} parent=1 // pred_region
      _
    $region13: #{model_forward.1} parent=1 // pred_fallthru
      _
    // Predicated region
    $region14: #{model_forward.1} parent=1 // pred_check
      _
    $region15: #{model_forward.1} parent=1 // pred_check_branch
      %26 = sbr.rel (0) target = $region17
    $region16: #{model_forward.1} parent=1 // pred_region
      %27 = dma.done [#allocation3], 8192
    $region17: #{model_forward.1} parent=1 // pred_fallthru
      _
    %p29 = scmp.eq.s32.totalorder 0, 0
    // Predicated region
    $region18: #{model_forward.1} parent=1 // pred_check
      %p30 = pneg %p29
    $region19: #{model_forward.1} parent=1 // pred_check_branch
      %32 = sbr.rel (%p30) target = $region21
    $region20: #{model_forward.1} parent=1 // pred_region
      %33 = vst [vmem:[%s3] sm:$0xff] 0.0
      %34 = vst [vmem:[%s3 + $0x8] sm:$0xff] 0.0
    $region21: #{model_forward.1} parent=1 // pred_fallthru
      _
    %v35 = vld [vmem:[%s3] sm:$0xff]
    %v36 = vld [vmem:[%s3 + $0x8] sm:$0xff]
    %v37 = vld [vmem:[%s0] sm:$0xff]
    %v38 = vld [vmem:[%s0 + $0x8] sm:$0xff]
    %v39 = vld [vmem:[%s0 + $0x10] sm:$0xff]
    %v40 = vld [vmem:[%s0 + $0x18] sm:$0xff]
    %v41 = vld [vmem:[%s0 + $0x20] sm:$0xff]
    %v42 = vld [vmem:[%s0 + $0x28] sm:$0xff]
    %v43 = vld [vmem:[%s0 + $0x30] sm:$0xff]
    %v44 = vld [vmem:[%s0 + $0x38] sm:$0xff]
    %v45 = vld [vmem:[#allocation2] sm:$0xf]
    %v46 = vld [vmem:[#allocation2 + $0x4] sm:$0xf]
    %v47 = vld [vmem:[#allocation2 + $0x8] sm:$0xf]
    %v48 = vld [vmem:[#allocation2 + $0xc] sm:$0xf]
    %v49 = vld [vmem:[#allocation2 + $0x10] sm:$0xf]
    %v50 = vld [vmem:[#allocation2 + $0x14] sm:$0xf]
    %v51 = vld [vmem:[#allocation2 + $0x18] sm:$0xf]
    %v52 = vld [vmem:[#allocation2 + $0x1c] sm:$0xf]
    %v53 = vld [vmem:[#allocation2 + $0x20] sm:$0xf]
    %v54 = vld [vmem:[#allocation2 + $0x24] sm:$0xf]
    %v55 = vld [vmem:[#allocation2 + $0x28] sm:$0xf]
    %v56 = vld [vmem:[#allocation2 + $0x2c] sm:$0xf]
    %v57 = vld [vmem:[#allocation2 + $0x30] sm:$0xf]
    %v58 = vld [vmem:[#allocation2 + $0x34] sm:$0xf]
    %v59 = vld [vmem:[#allocation2 + $0x38] sm:$0xf]
    %v60 = vld [vmem:[#allocation2 + $0x3c] sm:$0xf]
    %v61 = vld [vmem:[#allocation2 + $0x40] sm:$0xf]
    %v62 = vld [vmem:[#allocation2 + $0x44] sm:$0xf]
    %v63 = vld [vmem:[#allocation2 + $0x48] sm:$0xf]
    %v64 = vld [vmem:[#allocation2 + $0x4c] sm:$0xf]
    %v65 = vld [vmem:[#allocation2 + $0x50] sm:$0xf]
    %v66 = vld [vmem:[#allocation2 + $0x54] sm:$0xf]
    %v67 = vld [vmem:[#allocation2 + $0x58] sm:$0xf]
    %v68 = vld [vmem:[#allocation2 + $0x5c] sm:$0xf]
    %v69 = vld [vmem:[#allocation2 + $0x60] sm:$0xf]
    %v70 = vld [vmem:[#allocation2 + $0x64] sm:$0xf]
    %v71 = vld [vmem:[#allocation2 + $0x68] sm:$0xf]
    %v72 = vld [vmem:[#allocation2 + $0x6c] sm:$0xf]
    %v73 = vld [vmem:[#allocation2 + $0x70] sm:$0xf]
    %v74 = vld [vmem:[#allocation2 + $0x74] sm:$0xf]
    %v75 = vld [vmem:[#allocation2 + $0x78] sm:$0xf]
    %v76 = vld [vmem:[#allocation2 + $0x7c] sm:$0xf]
    %v77 = vld [vmem:[#allocation2 + $0x80] sm:$0xf]
    %v78 = vld [vmem:[#allocation2 + $0x84] sm:$0xf]
    %v79 = vld [vmem:[#allocation2 + $0x88] sm:$0xf]
    %v80 = vld [vmem:[#allocation2 + $0x8c] sm:$0xf]
    %v81 = vld [vmem:[#allocation2 + $0x90] sm:$0xf]
    %v82 = vld [vmem:[#allocation2 + $0x94] sm:$0xf]
    %v83 = vld [vmem:[#allocation2 + $0x98] sm:$0xf]
    %v84 = vld [vmem:[#allocation2 + $0x9c] sm:$0xf]
    %v85 = vld [vmem:[#allocation2 + $0xa0] sm:$0xf]
    %v86 = vld [vmem:[#allocation2 + $0xa4] sm:$0xf]
    %v87 = vld [vmem:[#allocation2 + $0xa8] sm:$0xf]
    %v88 = vld [vmem:[#allocation2 + $0xac] sm:$0xf]
    %v89 = vld [vmem:[#allocation2 + $0xb0] sm:$0xf]
    %v90 = vld [vmem:[#allocation2 + $0xb4] sm:$0xf]
    %v91 = vld [vmem:[#allocation2 + $0xb8] sm:$0xf]
    %v92 = vld [vmem:[#allocation2 + $0xbc] sm:$0xf]
    %v93 = vld [vmem:[#allocation2 + $0xc0] sm:$0xf]
    %v94 = vld [vmem:[#allocation2 + $0xc4] sm:$0xf]
    %v95 = vld [vmem:[#allocation2 + $0xc8] sm:$0xf]
    %v96 = vld [vmem:[#allocation2 + $0xcc] sm:$0xf]
    %v97 = vld [vmem:[#allocation2 + $0xd0] sm:$0xf]
    %v98 = vld [vmem:[#allocation2 + $0xd4] sm:$0xf]
    %v99 = vld [vmem:[#allocation2 + $0xd8] sm:$0xf]
    %v100 = vld [vmem:[#allocation2 + $0xdc] sm:$0xf]
    %v101 = vld [vmem:[#allocation2 + $0xe0] sm:$0xf]
    %v102 = vld [vmem:[#allocation2 + $0xe4] sm:$0xf]
    %v103 = vld [vmem:[#allocation2 + $0xe8] sm:$0xf]
    %v104 = vld [vmem:[#allocation2 + $0xec] sm:$0xf]
    %v105 = vld [vmem:[#allocation2 + $0xf0] sm:$0xf]
    %v106 = vld [vmem:[#allocation2 + $0xf4] sm:$0xf]
    %v107 = vld [vmem:[#allocation2 + $0xf8] sm:$0xf]
    %v108 = vld [vmem:[#allocation2 + $0xfc] sm:$0xf]
    %v109 = vld [vmem:[#allocation2 + $0x100] sm:$0xf]
    %v110 = vld [vmem:[#allocation2 + $0x104] sm:$0xf]
    %v111 = vld [vmem:[#allocation2 + $0x108] sm:$0xf]
    %v112 = vld [vmem:[#allocation2 + $0x10c] sm:$0xf]
    %v113 = vld [vmem:[#allocation2 + $0x110] sm:$0xf]
    %v114 = vld [vmem:[#allocation2 + $0x114] sm:$0xf]
    %v115 = vld [vmem:[#allocation2 + $0x118] sm:$0xf]
    %v116 = vld [vmem:[#allocation2 + $0x11c] sm:$0xf]
    %v117 = vld [vmem:[#allocation2 + $0x120] sm:$0xf]
    %v118 = vld [vmem:[#allocation2 + $0x124] sm:$0xf]
    %v119 = vld [vmem:[#allocation2 + $0x128] sm:$0xf]
    %v120 = vld [vmem:[#allocation2 + $0x12c] sm:$0xf]
    %v121 = vld [vmem:[#allocation2 + $0x130] sm:$0xf]
    %v122 = vld [vmem:[#allocation2 + $0x134] sm:$0xf]
    %v123 = vld [vmem:[#allocation2 + $0x138] sm:$0xf]
    %v124 = vld [vmem:[#allocation2 + $0x13c] sm:$0xf]
    %v125 = vld [vmem:[#allocation2 + $0x140] sm:$0xf]
    %v126 = vld [vmem:[#allocation2 + $0x144] sm:$0xf]
    %v127 = vld [vmem:[#allocation2 + $0x148] sm:$0xf]
    %v128 = vld [vmem:[#allocation2 + $0x14c] sm:$0xf]
    %v129 = vld [vmem:[#allocation2 + $0x150] sm:$0xf]
    %v130 = vld [vmem:[#allocation2 + $0x154] sm:$0xf]
    %v131 = vld [vmem:[#allocation2 + $0x158] sm:$0xf]
    %v132 = vld [vmem:[#allocation2 + $0x15c] sm:$0xf]
    %v133 = vld [vmem:[#allocation2 + $0x160] sm:$0xf]
    %v134 = vld [vmem:[#allocation2 + $0x164] sm:$0xf]
    %v135 = vld [vmem:[#allocation2 + $0x168] sm:$0xf]
    %v136 = vld [vmem:[#allocation2 + $0x16c] sm:$0xf]
    %v137 = vld [vmem:[#allocation2 + $0x170] sm:$0xf]
    %v138 = vld [vmem:[#allocation2 + $0x174] sm:$0xf]
    %v139 = vld [vmem:[#allocation2 + $0x178] sm:$0xf]
    %v140 = vld [vmem:[#allocation2 + $0x17c] sm:$0xf]
    %v141 = vld [vmem:[#allocation2 + $0x180] sm:$0xf]
    %v142 = vld [vmem:[#allocation2 + $0x184] sm:$0xf]
    %v143 = vld [vmem:[#allocation2 + $0x188] sm:$0xf]
    %v144 = vld [vmem:[#allocation2 + $0x18c] sm:$0xf]
    %v145 = vld [vmem:[#allocation2 + $0x190] sm:$0xf]
    %v146 = vld [vmem:[#allocation2 + $0x194] sm:$0xf]
    %v147 = vld [vmem:[#allocation2 + $0x198] sm:$0xf]
    %v148 = vld [vmem:[#allocation2 + $0x19c] sm:$0xf]
    %v149 = vld [vmem:[#allocation2 + $0x1a0] sm:$0xf]
    %v150 = vld [vmem:[#allocation2 + $0x1a4] sm:$0xf]
    %v151 = vld [vmem:[#allocation2 + $0x1a8] sm:$0xf]
    %v152 = vld [vmem:[#allocation2 + $0x1ac] sm:$0xf]
    %v153 = vld [vmem:[#allocation2 + $0x1b0] sm:$0xf]
    %v154 = vld [vmem:[#allocation2 + $0x1b4] sm:$0xf]
    %v155 = vld [vmem:[#allocation2 + $0x1b8] sm:$0xf]
    %v156 = vld [vmem:[#allocation2 + $0x1bc] sm:$0xf]
    %v157 = vld [vmem:[#allocation2 + $0x1c0] sm:$0xf]
    %v158 = vld [vmem:[#allocation2 + $0x1c4] sm:$0xf]
    %v159 = vld [vmem:[#allocation2 + $0x1c8] sm:$0xf]
    %v160 = vld [vmem:[#allocation2 + $0x1cc] sm:$0xf]
    %v161 = vld [vmem:[#allocation2 + $0x1d0] sm:$0xf]
    %v162 = vld [vmem:[#allocation2 + $0x1d4] sm:$0xf]
    %v163 = vld [vmem:[#allocation2 + $0x1d8] sm:$0xf]
    %v164 = vld [vmem:[#allocation2 + $0x1dc] sm:$0xf]
    %v165 = vld [vmem:[#allocation2 + $0x1e0] sm:$0xf]
    %v166 = vld [vmem:[#allocation2 + $0x1e4] sm:$0xf]
    %v167 = vld [vmem:[#allocation2 + $0x1e8] sm:$0xf]
    %v168 = vld [vmem:[#allocation2 + $0x1ec] sm:$0xf]
    %v169 = vld [vmem:[#allocation2 + $0x1f0] sm:$0xf]
    %v170 = vld [vmem:[#allocation2 + $0x1f4] sm:$0xf]
    %v171 = vld [vmem:[#allocation2 + $0x1f8] sm:$0xf]
    %v172 = vld [vmem:[#allocation2 + $0x1fc] sm:$0xf]
    %v181 = vunpack.c.l.b16 %v37
    %v182 = vunpack.c.h.b16 %v37
    %v183 = vunpack.c.l.b16 %v38
    %v184 = vunpack.c.h.b16 %v38
    %v185 = vunpack.c.l.b16 %v39
    %v186 = vunpack.c.h.b16 %v39
    %v187 = vunpack.c.l.b16 %v40
    %v188 = vunpack.c.h.b16 %v40
    %v189 = vunpack.c.l.b16 %v41
    %v190 = vunpack.c.h.b16 %v41
    %v191 = vunpack.c.l.b16 %v42
    %v192 = vunpack.c.h.b16 %v42
    %v193 = vunpack.c.l.b16 %v43
    %v194 = vunpack.c.h.b16 %v43
    %v195 = vunpack.c.l.b16 %v44
    %v196 = vunpack.c.h.b16 %v44
    %v197 = vpack.c.b16 %v189, %v181
    %v198 = vpack.c.b16 %v190, %v182
    %v199 = vpack.c.b16 %v191, %v183
    %v200 = vpack.c.b16 %v192, %v184
    %v201 = vpack.c.b16 %v193, %v185
    %v202 = vpack.c.b16 %v194, %v186
    %v203 = vpack.c.b16 %v195, %v187
    %v204 = vpack.c.b16 %v196, %v188
    %v341 = vunpack.c.l.b16 %v45
    %v342 = vunpack.c.l.b16 %v46
    %v343 = vunpack.c.l.b16 %v47
    %v344 = vunpack.c.l.b16 %v48
    %v345 = vunpack.c.l.b16 %v49
    %v346 = vunpack.c.l.b16 %v50
    %v347 = vunpack.c.l.b16 %v51
    %v348 = vunpack.c.l.b16 %v52
    %v349 = vunpack.c.l.b16 %v53
    %v350 = vunpack.c.l.b16 %v54
    %v351 = vunpack.c.l.b16 %v55
    %v352 = vunpack.c.l.b16 %v56
    %v353 = vunpack.c.l.b16 %v57
    %v354 = vunpack.c.l.b16 %v58
    %v355 = vunpack.c.l.b16 %v59
    %v356 = vunpack.c.l.b16 %v60
    %v357 = vunpack.c.l.b16 %v61
    %v358 = vunpack.c.l.b16 %v62
    %v359 = vunpack.c.l.b16 %v63
    %v360 = vunpack.c.l.b16 %v64
    %v361 = vunpack.c.l.b16 %v65
    %v362 = vunpack.c.l.b16 %v66
    %v363 = vunpack.c.l.b16 %v67
    %v364 = vunpack.c.l.b16 %v68
    %v365 = vunpack.c.l.b16 %v69
    %v366 = vunpack.c.l.b16 %v70
    %v367 = vunpack.c.l.b16 %v71
    %v368 = vunpack.c.l.b16 %v72
    %v369 = vunpack.c.l.b16 %v73
    %v370 = vunpack.c.l.b16 %v74
    %v371 = vunpack.c.l.b16 %v75
    %v372 = vunpack.c.l.b16 %v76
    %v373 = vunpack.c.l.b16 %v77
    %v374 = vunpack.c.l.b16 %v78
    %v375 = vunpack.c.l.b16 %v79
    %v376 = vunpack.c.l.b16 %v80
    %v377 = vunpack.c.l.b16 %v81
    %v378 = vunpack.c.l.b16 %v82
    %v379 = vunpack.c.l.b16 %v83
    %v380 = vunpack.c.l.b16 %v84
    %v381 = vunpack.c.l.b16 %v85
    %v382 = vunpack.c.l.b16 %v86
    %v383 = vunpack.c.l.b16 %v87
    %v384 = vunpack.c.l.b16 %v88
    %v385 = vunpack.c.l.b16 %v89
    %v386 = vunpack.c.l.b16 %v90
    %v387 = vunpack.c.l.b16 %v91
    %v388 = vunpack.c.l.b16 %v92
    %v389 = vunpack.c.l.b16 %v93
    %v390 = vunpack.c.l.b16 %v94
    %v391 = vunpack.c.l.b16 %v95
    %v392 = vunpack.c.l.b16 %v96
    %v393 = vunpack.c.l.b16 %v97
    %v394 = vunpack.c.l.b16 %v98
    %v395 = vunpack.c.l.b16 %v99
    %v396 = vunpack.c.l.b16 %v100
    %v397 = vunpack.c.l.b16 %v101
    %v398 = vunpack.c.l.b16 %v102
    %v399 = vunpack.c.l.b16 %v103
    %v400 = vunpack.c.l.b16 %v104
    %v401 = vunpack.c.l.b16 %v105
    %v402 = vunpack.c.l.b16 %v106
    %v403 = vunpack.c.l.b16 %v107
    %v404 = vunpack.c.l.b16 %v108
    %v405 = vunpack.c.l.b16 %v109
    %v406 = vunpack.c.l.b16 %v110
    %v407 = vunpack.c.l.b16 %v111
    %v408 = vunpack.c.l.b16 %v112
    %v409 = vunpack.c.l.b16 %v113
    %v410 = vunpack.c.l.b16 %v114
    %v411 = vunpack.c.l.b16 %v115
    %v412 = vunpack.c.l.b16 %v116
    %v413 = vunpack.c.l.b16 %v117
    %v414 = vunpack.c.l.b16 %v118
    %v415 = vunpack.c.l.b16 %v119
    %v416 = vunpack.c.l.b16 %v120
    %v417 = vunpack.c.l.b16 %v121
    %v418 = vunpack.c.l.b16 %v122
    %v419 = vunpack.c.l.b16 %v123
    %v420 = vunpack.c.l.b16 %v124
    %v421 = vunpack.c.l.b16 %v125
    %v422 = vunpack.c.l.b16 %v126
    %v423 = vunpack.c.l.b16 %v127
    %v424 = vunpack.c.l.b16 %v128
    %v425 = vunpack.c.l.b16 %v129
    %v426 = vunpack.c.l.b16 %v130
    %v427 = vunpack.c.l.b16 %v131
    %v428 = vunpack.c.l.b16 %v132
    %v429 = vunpack.c.l.b16 %v133
    %v430 = vunpack.c.l.b16 %v134
    %v431 = vunpack.c.l.b16 %v135
    %v432 = vunpack.c.l.b16 %v136
    %v433 = vunpack.c.l.b16 %v137
    %v434 = vunpack.c.l.b16 %v138
    %v435 = vunpack.c.l.b16 %v139
    %v436 = vunpack.c.l.b16 %v140
    %v437 = vunpack.c.l.b16 %v141
    %v438 = vunpack.c.l.b16 %v142
    %v439 = vunpack.c.l.b16 %v143
    %v440 = vunpack.c.l.b16 %v144
    %v441 = vunpack.c.l.b16 %v145
    %v442 = vunpack.c.l.b16 %v146
    %v443 = vunpack.c.l.b16 %v147
    %v444 = vunpack.c.l.b16 %v148
    %v445 = vunpack.c.l.b16 %v149
    %v446 = vunpack.c.l.b16 %v150
    %v447 = vunpack.c.l.b16 %v151
    %v448 = vunpack.c.l.b16 %v152
    %v449 = vunpack.c.l.b16 %v153
    %v450 = vunpack.c.l.b16 %v154
    %v451 = vunpack.c.l.b16 %v155
    %v452 = vunpack.c.l.b16 %v156
    %v453 = vunpack.c.l.b16 %v157
    %v454 = vunpack.c.l.b16 %v158
    %v455 = vunpack.c.l.b16 %v159
    %v456 = vunpack.c.l.b16 %v160
    %v457 = vunpack.c.l.b16 %v161
    %v458 = vunpack.c.l.b16 %v162
    %v459 = vunpack.c.l.b16 %v163
    %v460 = vunpack.c.l.b16 %v164
    %v461 = vunpack.c.l.b16 %v165
    %v462 = vunpack.c.l.b16 %v166
    %v463 = vunpack.c.l.b16 %v167
    %v464 = vunpack.c.l.b16 %v168
    %v465 = vunpack.c.l.b16 %v169
    %v466 = vunpack.c.l.b16 %v170
    %v467 = vunpack.c.l.b16 %v171
    %v468 = vunpack.c.l.b16 %v172
    %v469 = vpack.c.b16 %v342, %v341
    %v470 = vpack.c.b16 %v344, %v343
    %v471 = vpack.c.b16 %v346, %v345
    %v472 = vpack.c.b16 %v348, %v347
    %v473 = vpack.c.b16 %v350, %v349
    %v474 = vpack.c.b16 %v352, %v351
    %v475 = vpack.c.b16 %v354, %v353
    %v476 = vpack.c.b16 %v356, %v355
    %v477 = vpack.c.b16 %v358, %v357
    %v478 = vpack.c.b16 %v360, %v359
    %v479 = vpack.c.b16 %v362, %v361
    %v480 = vpack.c.b16 %v364, %v363
    %v481 = vpack.c.b16 %v366, %v365
    %v482 = vpack.c.b16 %v368, %v367
    %v483 = vpack.c.b16 %v370, %v369
    %v484 = vpack.c.b16 %v372, %v371
    %v485 = vpack.c.b16 %v374, %v373
    %v486 = vpack.c.b16 %v376, %v375
    %v487 = vpack.c.b16 %v378, %v377
    %v488 = vpack.c.b16 %v380, %v379
    %v489 = vpack.c.b16 %v382, %v381
    %v490 = vpack.c.b16 %v384, %v383
    %v491 = vpack.c.b16 %v386, %v385
    %v492 = vpack.c.b16 %v388, %v387
    %v493 = vpack.c.b16 %v390, %v389
    %v494 = vpack.c.b16 %v392, %v391
    %v495 = vpack.c.b16 %v394, %v393
    %v496 = vpack.c.b16 %v396, %v395
    %v497 = vpack.c.b16 %v398, %v397
    %v498 = vpack.c.b16 %v400, %v399
    %v499 = vpack.c.b16 %v402, %v401
    %v500 = vpack.c.b16 %v404, %v403
    %v501 = vpack.c.b16 %v406, %v405
    %v502 = vpack.c.b16 %v408, %v407
    %v503 = vpack.c.b16 %v410, %v409
    %v504 = vpack.c.b16 %v412, %v411
    %v505 = vpack.c.b16 %v414, %v413
    %v506 = vpack.c.b16 %v416, %v415
    %v507 = vpack.c.b16 %v418, %v417
    %v508 = vpack.c.b16 %v420, %v419
    %v509 = vpack.c.b16 %v422, %v421
    %v510 = vpack.c.b16 %v424, %v423
    %v511 = vpack.c.b16 %v426, %v425
    %v512 = vpack.c.b16 %v428, %v427
    %v513 = vpack.c.b16 %v430, %v429
    %v514 = vpack.c.b16 %v432, %v431
    %v515 = vpack.c.b16 %v434, %v433
    %v516 = vpack.c.b16 %v436, %v435
    %v517 = vpack.c.b16 %v438, %v437
    %v518 = vpack.c.b16 %v440, %v439
    %v519 = vpack.c.b16 %v442, %v441
    %v520 = vpack.c.b16 %v444, %v443
    %v521 = vpack.c.b16 %v446, %v445
    %v522 = vpack.c.b16 %v448, %v447
    %v523 = vpack.c.b16 %v450, %v449
    %v524 = vpack.c.b16 %v452, %v451
    %v525 = vpack.c.b16 %v454, %v453
    %v526 = vpack.c.b16 %v456, %v455
    %v527 = vpack.c.b16 %v458, %v457
    %v528 = vpack.c.b16 %v460, %v459
    %v529 = vpack.c.b16 %v462, %v461
    %v530 = vpack.c.b16 %v464, %v463
    %v531 = vpack.c.b16 %v466, %v465
    %v532 = vpack.c.b16 %v468, %v467
    %597 = vmatprep.subr.bf16.mxu0 0
    %598 = vmatpush1.bf16.msra.mxu0 %v469
    %599 = vmatprep.subr.bf16.mxu0 0
    %600 = vmatpush1.bf16.msra.mxu0 %v470
    %601 = vmatprep.subr.bf16.mxu0 0
    %602 = vmatpush1.bf16.msra.mxu0 %v471
    %603 = vmatprep.subr.bf16.mxu0 0
    %604 = vmatpush1.bf16.msra.mxu0 %v472
    %605 = vmatprep.subr.bf16.mxu0 0
    %606 = vmatpush1.bf16.msra.mxu0 %v473
    %607 = vmatprep.subr.bf16.mxu0 0
    %608 = vmatpush1.bf16.msra.mxu0 %v474
    %609 = vmatprep.subr.bf16.mxu0 0
    %610 = vmatpush1.bf16.msra.mxu0 %v475
    %611 = vmatprep.subr.bf16.mxu0 0
    %612 = vmatpush1.bf16.msra.mxu0 %v476
    %613 = vmatprep.subr.bf16.mxu0 0
    %614 = vmatpush1.bf16.msra.mxu0 %v477
    %615 = vmatprep.subr.bf16.mxu0 0
    %616 = vmatpush1.bf16.msra.mxu0 %v478
    %617 = vmatprep.subr.bf16.mxu0 0
    %618 = vmatpush1.bf16.msra.mxu0 %v479
    %619 = vmatprep.subr.bf16.mxu0 0
    %620 = vmatpush1.bf16.msra.mxu0 %v480
    %621 = vmatprep.subr.bf16.mxu0 0
    %622 = vmatpush1.bf16.msra.mxu0 %v481
    %623 = vmatprep.subr.bf16.mxu0 0
    %624 = vmatpush1.bf16.msra.mxu0 %v482
    %625 = vmatprep.subr.bf16.mxu0 0
    %626 = vmatpush1.bf16.msra.mxu0 %v483
    %627 = vmatprep.subr.bf16.mxu0 0
    %628 = vmatpush1.bf16.msra.mxu0 %v484
    %629 = vmatprep.mubr.bf16.mxu0 %v198
    %630 = vmatmul.mubr.bf16.gmra.mrb[0].mxu0 %v197
    %v631 = vpop.f32.mrb[0].mxu0
    %v632 = vadd.f32 0.0, %v631
    %v633 = vpop.f32.mrb[0].mxu0
    %v634 = vpop.f32.mrb[0].mxu0
    %v635 = vadd.f32 0.0, %v634
    %v636 = vpop.f32.mrb[0].mxu0
    %637 = vdwg.mxu0
    %638 = vmatprep.subr.bf16.mxu0 0
    %639 = vmatpush1.bf16.msra.mxu0 %v485
    %640 = vmatprep.subr.bf16.mxu0 0
    %641 = vmatpush1.bf16.msra.mxu0 %v486
    %642 = vmatprep.subr.bf16.mxu0 0
    %643 = vmatpush1.bf16.msra.mxu0 %v487
    %644 = vmatprep.subr.bf16.mxu0 0
    %645 = vmatpush1.bf16.msra.mxu0 %v488
    %646 = vmatprep.subr.bf16.mxu0 0
    %647 = vmatpush1.bf16.msra.mxu0 %v489
    %648 = vmatprep.subr.bf16.mxu0 0
    %649 = vmatpush1.bf16.msra.mxu0 %v490
    %650 = vmatprep.subr.bf16.mxu0 0
    %651 = vmatpush1.bf16.msra.mxu0 %v491
    %652 = vmatprep.subr.bf16.mxu0 0
    %653 = vmatpush1.bf16.msra.mxu0 %v492
    %654 = vmatprep.subr.bf16.mxu0 0
    %655 = vmatpush1.bf16.msra.mxu0 %v493
    %656 = vmatprep.subr.bf16.mxu0 0
    %657 = vmatpush1.bf16.msra.mxu0 %v494
    %658 = vmatprep.subr.bf16.mxu0 0
    %659 = vmatpush1.bf16.msra.mxu0 %v495
    %660 = vmatprep.subr.bf16.mxu0 0
    %661 = vmatpush1.bf16.msra.mxu0 %v496
    %662 = vmatprep.subr.bf16.mxu0 0
    %663 = vmatpush1.bf16.msra.mxu0 %v497
    %664 = vmatprep.subr.bf16.mxu0 0
    %665 = vmatpush1.bf16.msra.mxu0 %v498
    %666 = vmatprep.subr.bf16.mxu0 0
    %667 = vmatpush1.bf16.msra.mxu0 %v499
    %668 = vmatprep.subr.bf16.mxu0 0
    %669 = vmatpush1.bf16.msra.mxu0 %v500
    %670 = vmatprep.mubr.bf16.mxu0 %v200
    %671 = vmatmul.mubr.bf16.gmra.mrb[0].mxu0 %v199
    %v672 = vpop.f32.mrb[0].mxu0
    %v673 = vadd.f32 %v632, %v672
    %v674 = vpop.f32.mrb[0].mxu0
    %v675 = vpop.f32.mrb[0].mxu0
    %v676 = vadd.f32 %v635, %v675
    %v677 = vpop.f32.mrb[0].mxu0
    %678 = vdwg.mxu0
    %679 = vmatprep.subr.bf16.mxu0 0
    %680 = vmatpush1.bf16.msra.mxu0 %v501
    %681 = vmatprep.subr.bf16.mxu0 0
    %682 = vmatpush1.bf16.msra.mxu0 %v502
    %683 = vmatprep.subr.bf16.mxu0 0
    %684 = vmatpush1.bf16.msra.mxu0 %v503
    %685 = vmatprep.subr.bf16.mxu0 0
    %686 = vmatpush1.bf16.msra.mxu0 %v504
    %687 = vmatprep.subr.bf16.mxu0 0
    %688 = vmatpush1.bf16.msra.mxu0 %v505
    %689 = vmatprep.subr.bf16.mxu0 0
    %690 = vmatpush1.bf16.msra.mxu0 %v506
    %691 = vmatprep.subr.bf16.mxu0 0
    %692 = vmatpush1.bf16.msra.mxu0 %v507
    %693 = vmatprep.subr.bf16.mxu0 0
    %694 = vmatpush1.bf16.msra.mxu0 %v508
    %695 = vmatprep.subr.bf16.mxu0 0
    %696 = vmatpush1.bf16.msra.mxu0 %v509
    %697 = vmatprep.subr.bf16.mxu0 0
    %698 = vmatpush1.bf16.msra.mxu0 %v510
    %699 = vmatprep.subr.bf16.mxu0 0
    %700 = vmatpush1.bf16.msra.mxu0 %v511
    %701 = vmatprep.subr.bf16.mxu0 0
    %702 = vmatpush1.bf16.msra.mxu0 %v512
    %703 = vmatprep.subr.bf16.mxu0 0
    %704 = vmatpush1.bf16.msra.mxu0 %v513
    %705 = vmatprep.subr.bf16.mxu0 0
    %706 = vmatpush1.bf16.msra.mxu0 %v514
    %707 = vmatprep.subr.bf16.mxu0 0
    %708 = vmatpush1.bf16.msra.mxu0 %v515
    %709 = vmatprep.subr.bf16.mxu0 0
    %710 = vmatpush1.bf16.msra.mxu0 %v516
    %711 = vmatprep.mubr.bf16.mxu0 %v202
    %712 = vmatmul.mubr.bf16.gmra.mrb[0].mxu0 %v201
    %v713 = vpop.f32.mrb[0].mxu0
    %v714 = vadd.f32 %v673, %v713
    %v715 = vpop.f32.mrb[0].mxu0
    %v716 = vpop.f32.mrb[0].mxu0
    %v717 = vadd.f32 %v676, %v716
    %v718 = vpop.f32.mrb[0].mxu0
    %719 = vdwg.mxu0
    %720 = vmatprep.subr.bf16.mxu0 0
    %721 = vmatpush1.bf16.msra.mxu0 %v517
    %722 = vmatprep.subr.bf16.mxu0 0
    %723 = vmatpush1.bf16.msra.mxu0 %v518
    %724 = vmatprep.subr.bf16.mxu0 0
    %725 = vmatpush1.bf16.msra.mxu0 %v519
    %726 = vmatprep.subr.bf16.mxu0 0
    %727 = vmatpush1.bf16.msra.mxu0 %v520
    %728 = vmatprep.subr.bf16.mxu0 0
    %729 = vmatpush1.bf16.msra.mxu0 %v521
    %730 = vmatprep.subr.bf16.mxu0 0
    %731 = vmatpush1.bf16.msra.mxu0 %v522
    %732 = vmatprep.subr.bf16.mxu0 0
    %733 = vmatpush1.bf16.msra.mxu0 %v523
    %734 = vmatprep.subr.bf16.mxu0 0
    %735 = vmatpush1.bf16.msra.mxu0 %v524
    %736 = vmatprep.subr.bf16.mxu0 0
    %737 = vmatpush1.bf16.msra.mxu0 %v525
    %738 = vmatprep.subr.bf16.mxu0 0
    %739 = vmatpush1.bf16.msra.mxu0 %v526
    %740 = vmatprep.subr.bf16.mxu0 0
    %741 = vmatpush1.bf16.msra.mxu0 %v527
    %742 = vmatprep.subr.bf16.mxu0 0
    %743 = vmatpush1.bf16.msra.mxu0 %v528
    %744 = vmatprep.subr.bf16.mxu0 0
    %745 = vmatpush1.bf16.msra.mxu0 %v529
    %746 = vmatprep.subr.bf16.mxu0 0
    %747 = vmatpush1.bf16.msra.mxu0 %v530
    %748 = vmatprep.subr.bf16.mxu0 0
    %749 = vmatpush1.bf16.msra.mxu0 %v531
    %750 = vmatprep.subr.bf16.mxu0 0
    %751 = vmatpush1.bf16.msra.mxu0 %v532
    %752 = vmatprep.mubr.bf16.mxu0 %v204
    %753 = vmatmul.mubr.bf16.gmra.mrb[0].mxu0 %v203
    %v754 = vpop.f32.mrb[0].mxu0
    %v755 = vadd.f32 %v714, %v754
    %v756 = vpop.f32.mrb[0].mxu0
    %v757 = vpop.f32.mrb[0].mxu0
    %v758 = vadd.f32 %v717, %v757
    %v759 = vpop.f32.mrb[0].mxu0
    %760 = vdwg.mxu0
    %v761 = vadd.f32 %v35, %v755
    %v762 = vadd.f32 %v36, %v758
    %763 = vst [vmem:[%s3] sm:$0xff] %v761
    %764 = vst [vmem:[%s3 + $0x8] sm:$0xff] %v762
    // Predicated region
    $region22: #{model_forward.1} parent=1 // pred_check
      %p765 = pneg %p29
    $region23: #{model_forward.1} parent=1 // pred_check_branch
      %767 = sbr.rel (%p765) target = $region25
    $region24: #{model_forward.1} parent=1 // pred_region
      %v768 = vld [vmem:[%s3] sm:$0xff]
      %v769 = vld [vmem:[%s3 + $0x8] sm:$0xff]
      %v770 = vld [vmem:[%s2] sm:$0x1]
      %v772 = vlaneseq
      %v773 = vshrl.u32 %v772, 7
      %v774 = vsub.s32 0, %v773
      %v775 = vrot.slane %v770, %v774
      %v777 = vadd.f32 %v768, %v775
      %v778 = vadd.f32 %v769, %v775
      %779 = vst [vmem:[%s3] sm:$0xff] %v777
      %780 = vst [vmem:[%s3 + $0x8] sm:$0xff] %v778
    $region25: #{model_forward.1} parent=1 // pred_fallthru
      _
    // Predicated region
    $region26: #{model_forward.1} parent=1 // pred_check
      _
    $region27: #{model_forward.1} parent=1 // pred_check_branch
      %782 = sbr.rel (0) target = $region29
    $region28: #{model_forward.1} parent=1 // pred_region
      _
    $region29: #{model_forward.1} parent=1 // pred_fallthru
      _
    // Predicated region
    $region30: #{model_forward.1} parent=1 // pred_check
      _
    $region31: #{model_forward.1} parent=1 // pred_check_branch
      %784 = sbr.rel (0) target = $region33
    $region32: #{model_forward.1} parent=1 // pred_region
      _
    $region33: #{model_forward.1} parent=1 // pred_fallthru
      _
    %785 = vsyncpa [#allocation3], 1

</llo_original>
